<compile_context>
chip_gen: v5e
topology: v5e:2x2
jax: 0.10.0
libtpu: 0.0.40
codegen_flags: <defaults>
</compile_context>

<pallas_src>
import functools

import jax
import jax.numpy as jnp
from jax.experimental import pallas as pl
from jax.experimental.pallas import tpu as pltpu

EPS = 1e-12  # F.normalize default eps


def _round_up(x, m):
    return ((x + m - 1) // m) * m


def mlp_kernel(x_ref, w1_ref, b1_ref, w2_ref, b2_ref, o_ref):
    # --- F.normalize(x): L2 normalize rows, kept in f32 (cheap on VPU/EUP) ---
    x = x_ref[...].astype(jnp.float32)
    sq = jnp.sum(x * x, axis=1, keepdims=True)
    # 1 / max(||x||, eps)  ==  rsqrt(max(||x||^2, eps^2))  (single EUP op + vmul)
    inv = jax.lax.rsqrt(jnp.maximum(sq, EPS * EPS))
    xn = (x * inv).astype(jnp.bfloat16)

    # --- lin1 + ReLU (bf16 operands, f32 accumulation on the MXU) ---
    h = jnp.dot(xn, w1_ref[...], preferred_element_type=jnp.float32) + b1_ref[...]
    h = jnp.maximum(h, 0.0)

    # F.dropout(p=0.5, training=self.training): eval-mode identity.
    # TODO(synk): training-mode dropout would use pltpu.prng_seed / prng_random_bits.

    # --- lin2 ---
    y = jnp.dot(h.astype(jnp.bfloat16), w2_ref[...],
                preferred_element_type=jnp.float32) + b2_ref[...]
    o_ref[...] = y.astype(o_ref.dtype)


def _pick_row_tile(tm, d_in, d_hid_p, d_out_p, budget_bytes):
    """Shrink the row tile until the (double-buffered) working set fits VMEM."""
    # Grid-invariant weight/bias blocks (bf16 weights, f32 biases), counted x2
    # to be conservative about double-buffering.
    w_bytes = 2 * (d_in * d_hid_p * 2 + d_hid_p * d_out_p * 2
                   + d_hid_p * 4 + d_out_p * 4)
    while tm > 8:
        tile_bytes = (
            2 * tm * d_in * 4          # x tile, double-buffered (f32)
            + 2 * tm * d_out_p * 4     # out tile, double-buffered (f32)
            + tm * d_in * 2            # xn (bf16)
            + tm * d_hid_p * 4         # hidden activation (f32)
            + tm * d_hid_p * 2         # hidden cast to bf16
            + tm * d_out_p * 4         # y (f32)
        )
        if w_bytes + tile_bytes <= budget_bytes:
            break
        tm //= 2
    return max(tm, 8)


@functools.partial(jax.jit, static_argnames=("tm", "vmem_budget_bytes"))
def mlp_forward(x, w1, b1, w2, b2, *, tm=512, vmem_budget_bytes=40 * 1024 * 1024):
    n, d_in = x.shape
    d_hid = w1.shape[1]
    d_out = w2.shape[1]

    # Lane-dense hidden / output dims (multiples of 128); extra cols/rows are
    # zero so the math is unchanged, padding is sliced off at the end.
    d_hid_p = _round_up(d_hid, 128)
    d_out_p = _round_up(d_out, 128)

    # Row tile: respect sublane granularity (8) and the VMEM budget
    # (conservative enough for v7x's 64 MiB per TensorCore).
    tm = min(tm, _round_up(n, 8))
    tm = _pick_row_tile(tm, d_in, d_hid_p, d_out_p, vmem_budget_bytes)
    n_p = _round_up(n, tm)

    x_p = jnp.pad(x.astype(jnp.float32), ((0, n_p - n), (0, 0)))
    w1_p = jnp.pad(w1, ((0, 0), (0, d_hid_p - d_hid))).astype(jnp.bfloat16)
    b1_p = jnp.pad(b1.astype(jnp.float32), ((0, 0), (0, d_hid_p - d_hid)))
    w2_p = jnp.pad(w2, ((0, d_hid_p - d_hid), (0, d_out_p - d_out))).astype(jnp.bfloat16)
    b2_p = jnp.pad(b2.astype(jnp.float32), ((0, 0), (0, d_out_p - d_out)))

    out = pl.pallas_call(
        mlp_kernel,
        out_shape=jax.ShapeDtypeStruct((n_p, d_out_p), jnp.float32),
        grid=(n_p // tm,),
        in_specs=[
            pl.BlockSpec((tm, d_in), lambda i: (i, 0)),        # x: row-tiled
            pl.BlockSpec((d_in, d_hid_p), lambda i: (0, 0)),   # w1: grid-invariant
            pl.BlockSpec((1, d_hid_p), lambda i: (0, 0)),      # b1: grid-invariant
            pl.BlockSpec((d_hid_p, d_out_p), lambda i: (0, 0)),# w2: grid-invariant
            pl.BlockSpec((1, d_out_p), lambda i: (0, 0)),      # b2: grid-invariant
        ],
        out_specs=pl.BlockSpec((tm, d_out_p), lambda i: (i, 0)),
        compiler_params=pltpu.CompilerParams(
            dimension_semantics=("parallel",),
            vmem_limit_bytes=64 * 1024 * 1024,
        ),
    )(x_p, w1_p, b1_p, w2_p, b2_p)

    return out[:n, :d_out]


def init_linear_params(key, fan_in, fan_out):
    # Deterministic init mimicking torch.nn.Linear's U(-1/sqrt(fan_in), 1/sqrt(fan_in)).
    kw, kb = jax.random.split(key)
    bound = 1.0 / (fan_in ** 0.5)
    w = jax.random.uniform(kw, (fan_in, fan_out), jnp.float32, -bound, bound)
    b = jax.random.uniform(kb, (1, fan_out), jnp.float32, -bound, bound)
    return w, b


if __name__ == "__main__":
    input_dim, hidden_channels, output_dim = 16, 32, 8
    batch = 8

    key = jax.random.PRNGKey(0)
    kx, k1, k2 = jax.random.split(key, 3)

    x = jax.random.normal(kx, (batch, input_dim), jnp.float32)
    w1, b1 = init_linear_params(k1, input_dim, hidden_channels)
    w2, b2 = init_linear_params(k2, hidden_channels, output_dim)

    out = mlp_forward(x, w1, b1, w2, b2)
    jax.block_until_ready(out)

    # Pure-JAX reference (eval-mode forward) using the same bf16 operand /
    # f32-accumulation recipe as the kernel.
    xn = x / jnp.maximum(jnp.linalg.norm(x, axis=1, keepdims=True), EPS)
    h_ref = jnp.maximum(
        jnp.dot(xn.astype(jnp.bfloat16), w1.astype(jnp.bfloat16),
                preferred_element_type=jnp.float32) + b1, 0.0)
    ref = jnp.dot(h_ref.astype(jnp.bfloat16), w2.astype(jnp.bfloat16),
                  preferred_element_type=jnp.float32) + b2

    assert out.shape == (batch, output_dim)
    assert jnp.allclose(out, ref, atol=1e-2, rtol=1e-2), (
        f"max abs err {jnp.max(jnp.abs(out - ref))}")

    print("KERNEL_OK")
</pallas_src>

<mosaic_0001>
module attributes {stable_mosaic.version = 11 : i64} {
  func.func @mlp_kernel(%arg0: i32, %arg1: memref<8x16xf32, #tpu.memory_space<vmem>>, %arg2: memref<16x128xbf16, #tpu.memory_space<vmem>>, %arg3: memref<1x128xf32, #tpu.memory_space<vmem>>, %arg4: memref<128x128xbf16, #tpu.memory_space<vmem>>, %arg5: memref<1x128xf32, #tpu.memory_space<vmem>>, %arg6: memref<8x128xf32, #tpu.memory_space<vmem>>) attributes {dimension_semantics = [#tpu.dimension_semantics<parallel>], iteration_bounds = array<i64: 1>, scalar_prefetch = 0 : i64, scratch_operands = 0 : i64, tpu.core_type = #tpu.core_type<tc>, window_params = [{transform_indices = @transform_0, window_bounds = array<i64: 8, 16>}, {pipeline_mode = #tpu.pipeline_mode<synchronous>, transform_indices = @transform_1, window_bounds = array<i64: 16, 128>}, {pipeline_mode = #tpu.pipeline_mode<synchronous>, transform_indices = @transform_2, window_bounds = array<i64: 1, 128>}, {pipeline_mode = #tpu.pipeline_mode<synchronous>, transform_indices = @transform_3, window_bounds = array<i64: 128, 128>}, {pipeline_mode = #tpu.pipeline_mode<synchronous>, transform_indices = @transform_4, window_bounds = array<i64: 1, 128>}, {transform_indices = @transform_5, window_bounds = array<i64: 8, 128>}]} {
    %c0 = arith.constant 0 : index
    %c0_0 = arith.constant 0 : index
    %0 = vector.load %arg1[%c0, %c0_0] : memref<8x16xf32, #tpu.memory_space<vmem>>, vector<8x16xf32>
    %1 = arith.mulf %0, %0 : vector<8x16xf32>
    %cst = arith.constant dense<0.000000e+00> : vector<8xf32>
    %2 = vector.multi_reduction <add>, %1, %cst [1] : vector<8x16xf32> to vector<8xf32>
    %3 = vector.shape_cast %2 : vector<8xf32> to vector<8x1xf32>
    %cst_1 = arith.constant 1.000000e-24 : f32
    %4 = vector.broadcast %cst_1 : f32 to vector<8x1xf32>
    %5 = arith.maximumf %3, %4 : vector<8x1xf32>
    %6 = math.rsqrt %5 : vector<8x1xf32>
    %7 = vector.broadcast %6 : vector<8x1xf32> to vector<8x16xf32>
    %8 = arith.mulf %0, %7 : vector<8x16xf32>
    %9 = arith.truncf %8 : vector<8x16xf32> to vector<8x16xbf16>
    %c0_2 = arith.constant 0 : index
    %c0_3 = arith.constant 0 : index
    %10 = vector.load %arg2[%c0_2, %c0_3] : memref<16x128xbf16, #tpu.memory_space<vmem>>, vector<16x128xbf16>
    %cst_4 = arith.constant dense<0.000000e+00> : vector<8x128xf32>
    %11 = tpu.matmul %9, %10, %cst_4 {dimension_numbers = #tpu.dot_dimension_numbers<[1], [0], [0], [1], [0, 0, 1, 1], [], []>} : vector<8x16xbf16>, vector<16x128xbf16>, vector<8x128xf32> -> vector<8x128xf32>
    %c0_5 = arith.constant 0 : index
    %c0_6 = arith.constant 0 : index
    %12 = vector.load %arg3[%c0_5, %c0_6] : memref<1x128xf32, #tpu.memory_space<vmem>>, vector<1x128xf32>
    %13 = vector.broadcast %12 : vector<1x128xf32> to vector<8x128xf32>
    %14 = arith.addf %11, %13 : vector<8x128xf32>
    %cst_7 = arith.constant 0.000000e+00 : f32
    %15 = vector.broadcast %cst_7 : f32 to vector<8x128xf32>
    %16 = arith.maximumf %14, %15 : vector<8x128xf32>
    %17 = arith.truncf %16 : vector<8x128xf32> to vector<8x128xbf16>
    %c0_8 = arith.constant 0 : index
    %c0_9 = arith.constant 0 : index
    %18 = vector.load %arg4[%c0_8, %c0_9] : memref<128x128xbf16, #tpu.memory_space<vmem>>, vector<128x128xbf16>
    %cst_10 = arith.constant dense<0.000000e+00> : vector<8x128xf32>
    %19 = tpu.matmul %17, %18, %cst_10 {dimension_numbers = #tpu.dot_dimension_numbers<[1], [0], [0], [1], [0, 0, 1, 1], [], []>} : vector<8x128xbf16>, vector<128x128xbf16>, vector<8x128xf32> -> vector<8x128xf32>
    %c0_11 = arith.constant 0 : index
    %c0_12 = arith.constant 0 : index
    %20 = vector.load %arg5[%c0_11, %c0_12] : memref<1x128xf32, #tpu.memory_space<vmem>>, vector<1x128xf32>
    %21 = vector.broadcast %20 : vector<1x128xf32> to vector<8x128xf32>
    %22 = arith.addf %19, %21 : vector<8x128xf32>
    %c0_13 = arith.constant 0 : index
    %c0_14 = arith.constant 0 : index
    %23 = vector.load %arg6[%c0_13, %c0_14] : memref<8x128xf32, #tpu.memory_space<vmem>>, vector<8x128xf32>
    tpu.vector_store %arg6[%c0_13, %c0_14], %22 {strides = array<i32>} : memref<8x128xf32, #tpu.memory_space<vmem>>, vector<8x128xf32>,
    return
  }
  func.func @transform_0(%arg0: i32) -> (i32, i32) {
    %c0_i32 = arith.constant 0 : i32
    %c0_i32_0 = arith.constant 0 : i32
    return %arg0, %c0_i32 : i32, i32
  }
  func.func @transform_1(%arg0: i32) -> (i32, i32) {
    %c0_i32 = arith.constant 0 : i32
    %c0_i32_0 = arith.constant 0 : i32
    %c0_i32_1 = arith.constant 0 : i32
    return %c0_i32, %c0_i32_0 : i32, i32
  }
  func.func @transform_2(%arg0: i32) -> (i32, i32) {
    %c0_i32 = arith.constant 0 : i32
    %c0_i32_0 = arith.constant 0 : i32
    %c0_i32_1 = arith.constant 0 : i32
    return %c0_i32, %c0_i32_0 : i32, i32
  }
  func.func @transform_3(%arg0: i32) -> (i32, i32) {
    %c0_i32 = arith.constant 0 : i32
    %c0_i32_0 = arith.constant 0 : i32
    %c0_i32_1 = arith.constant 0 : i32
    return %c0_i32, %c0_i32_0 : i32, i32
  }
  func.func @transform_4(%arg0: i32) -> (i32, i32) {
    %c0_i32 = arith.constant 0 : i32
    %c0_i32_0 = arith.constant 0 : i32
    %c0_i32_1 = arith.constant 0 : i32
    return %c0_i32, %c0_i32_0 : i32, i32
  }
  func.func @transform_5(%arg0: i32) -> (i32, i32) {
    %c0_i32 = arith.constant 0 : i32
    %c0_i32_0 = arith.constant 0 : i32
    return %arg0, %c0_i32 : i32, i32
  }
}

</mosaic_0001>

<llo_original>
// kernel: mlp_forward.1
$region0: #{mlp_forward.1}
  #allocation0 [shape = 'u32[]', space=smem, size = 0x4, offset = 0x4, fixed_abs, tag = 'smem constant byte address 0x4 - core index']
  #allocation1 [shape = 'u32[72,128]{1,0:T(1,128)}', space=vmem, size = 0x9000, scoped, tag = 'internal scratch']
  %s0 = inlined_call_operand.vmem [shape: f32[8,16], index: 0, kind: input, shape index: {}]
  %s1 = inlined_call_operand.vmem [shape: bf16[16,128], index: 1, kind: input, shape index: {}]
  %s2 = inlined_call_operand.vmem [shape: f32[1,128], index: 2, kind: input, shape index: {}]
  %s3 = inlined_call_operand.vmem [shape: bf16[128,128], index: 3, kind: input, shape index: {}]
  %s4 = inlined_call_operand.vmem [shape: f32[1,128], index: 4, kind: input, shape index: {}]
  %s5 = inlined_call_operand.hbm [shape: f32[8,128], index: 5, kind: output, shape index: {}]
  %s6 = sld [smem:[#allocation0]]
  $region30: #{mlp_forward.1} parent=0
    _
  %s8 = ssub.s32 1, %s6
  %s9 = scalar_select 0, %s8, %s6
  $region1: #{mlp_forward.1} parent=0
    #allocation2 [shape = 'u8[4096]{0}', space=vmem, size = 0x1000, scoped, tag = 'output window, operand 0, single buffered']
    #allocation3 [shape = 's32[1]{0}', space=sflag, size = 0x4, scoped, tag = 'scoped memory for mlp_forward.1']
    %10 = vsyncpa [#allocation3], 0
    // Predicated region
    $region2: #{mlp_forward.1} parent=1 // pred_check
      _
    $region3: #{mlp_forward.1} parent=1 // pred_check_branch
      %12 = sbr.rel (0) target = $region5
    $region4: #{mlp_forward.1} parent=1 // pred_region
      _
    $region5: #{mlp_forward.1} parent=1 // pred_fallthru
      _
    // Predicated region
    $region6: #{mlp_forward.1} parent=1 // pred_check
      _
    $region7: #{mlp_forward.1} parent=1 // pred_check_branch
      %14 = sbr.rel (0) target = $region9
    $region8: #{mlp_forward.1} parent=1 // pred_region
      _
    $region9: #{mlp_forward.1} parent=1 // pred_fallthru
      _
    // Predicated region
    $region10: #{mlp_forward.1} parent=1 // pred_check
      _
    $region11: #{mlp_forward.1} parent=1 // pred_check_branch
      %16 = sbr.rel (0) target = $region13
    $region12: #{mlp_forward.1} parent=1 // pred_region
      _
    $region13: #{mlp_forward.1} parent=1 // pred_fallthru
      _
    // Predicated region
    $region14: #{mlp_forward.1} parent=1 // pred_check
      _
    $region15: #{mlp_forward.1} parent=1 // pred_check_branch
      %18 = sbr.rel (0) target = $region17
    $region16: #{mlp_forward.1} parent=1 // pred_region
      _
    $region17: #{mlp_forward.1} parent=1 // pred_fallthru
      _
    // Predicated region
    $region18: #{mlp_forward.1} parent=1 // pred_check
      _
    $region19: #{mlp_forward.1} parent=1 // pred_check_branch
      %20 = sbr.rel (0) target = $region21
    $region20: #{mlp_forward.1} parent=1 // pred_region
      _
    $region21: #{mlp_forward.1} parent=1 // pred_fallthru
      _
    %v22 = vld [vmem:[%s0] sm:$0xff]
    %v23 = vmul.f32 %v22, %v22
    %vm24 = vcmask 130048
    %v25 = vsel %vm24, %v23, 0.0
    %26 = vadd.xlane.f32.xlu0 %v25
    %v27 = vpop.xlane.xlu0 %26
    %v28 = vmax.f32 %v27, 1e-24
    %v29 = vrsqrt.pop %v28
    %v30 = vmul.f32 %v29, %v28
    %v31 = vmul.f32 %v30, %v29
    %v32 = vmul.f32 0.5, %v31
    %v33 = vsub.f32 1.5, %v32
    %v34 = vmul.f32 %v29, %v33
    %vm35 = vweird.f32 %v28
    %vm36 = vweird.f32 %v29
    %vm37 = vmor %vm35, %vm36
    %v38 = vsel %vm37, %v29, %v34
    %v39 = vmul.f32 %v22, %v38
    %v40 = vpack.c.bf16 %v39, %v39
    %v41 = vld [vmem:[%s1] sm:$0xf]
    %v42 = vld [vmem:[%s1 + $0x4] sm:$0xf]
    %v43 = vld [vmem:[%s2] sm:$0x1]
    %v45 = vperm.slane %v43, 0
    %v49 = vunpack.c.l.b16 %v41
    %v50 = vunpack.c.l.b16 %v42
    %v51 = vpack.c.b16 %v50, %v49
    %v54 = vsel %vm24, %v40, 0
    %56 = vmatpush.bf16.msra.mxu0 0
    %57 = vmatpush.bf16.msra.mxu0 0
    %58 = vmatpush.bf16.msra.mxu0 0
    %59 = vmatpush.bf16.msra.mxu0 0
    %60 = vmatpush.bf16.msra.mxu0 0
    %61 = vmatpush.bf16.msra.mxu0 0
    %62 = vmatpush.bf16.msra.mxu0 0
    %63 = vmatpush.bf16.msra.mxu0 %v51
    %64 = vmatmul.bf16.gmra.mxu0 %v54
    %v65 = vpop.f32.mrf.mxu0
    %v66 = vadd.f32 %v45, %v65
    %v67 = vpop.f32.mrf.mxu0
    %68 = vdwg.mxu0
    %v69 = vmax.f32 %v66, 0.0
    %v70 = vpack.c.bf16 %v69, %v69
    %v71 = vld [vmem:[%s3] sm:$0xf]
    %v72 = vld [vmem:[%s3 + $0x4] sm:$0xf]
    %v73 = vld [vmem:[%s3 + $0x8] sm:$0xf]
    %v74 = vld [vmem:[%s3 + $0xc] sm:$0xf]
    %v75 = vld [vmem:[%s3 + $0x10] sm:$0xf]
    %v76 = vld [vmem:[%s3 + $0x14] sm:$0xf]
    %v77 = vld [vmem:[%s3 + $0x18] sm:$0xf]
    %v78 = vld [vmem:[%s3 + $0x1c] sm:$0xf]
    %v79 = vld [vmem:[%s3 + $0x20] sm:$0xf]
    %v80 = vld [vmem:[%s3 + $0x24] sm:$0xf]
    %v81 = vld [vmem:[%s3 + $0x28] sm:$0xf]
    %v82 = vld [vmem:[%s3 + $0x2c] sm:$0xf]
    %v83 = vld [vmem:[%s3 + $0x30] sm:$0xf]
    %v84 = vld [vmem:[%s3 + $0x34] sm:$0xf]
    %v85 = vld [vmem:[%s3 + $0x38] sm:$0xf]
    %v86 = vld [vmem:[%s3 + $0x3c] sm:$0xf]
    %v87 = vld [vmem:[%s4] sm:$0x1]
    %v89 = vperm.slane %v87, 0
    %v107 = vunpack.c.l.b16 %v71
    %v108 = vunpack.c.l.b16 %v72
    %v109 = vunpack.c.l.b16 %v73
    %v110 = vunpack.c.l.b16 %v74
    %v111 = vunpack.c.l.b16 %v75
    %v112 = vunpack.c.l.b16 %v76
    %v113 = vunpack.c.l.b16 %v77
    %v114 = vunpack.c.l.b16 %v78
    %v115 = vunpack.c.l.b16 %v79
    %v116 = vunpack.c.l.b16 %v80
    %v117 = vunpack.c.l.b16 %v81
    %v118 = vunpack.c.l.b16 %v82
    %v119 = vunpack.c.l.b16 %v83
    %v120 = vunpack.c.l.b16 %v84
    %v121 = vunpack.c.l.b16 %v85
    %v122 = vunpack.c.l.b16 %v86
    %v123 = vpack.c.b16 %v108, %v107
    %v124 = vpack.c.b16 %v110, %v109
    %v125 = vpack.c.b16 %v112, %v111
    %v126 = vpack.c.b16 %v114, %v113
    %v127 = vpack.c.b16 %v116, %v115
    %v128 = vpack.c.b16 %v118, %v117
    %v129 = vpack.c.b16 %v120, %v119
    %v130 = vpack.c.b16 %v122, %v121
    %139 = vmatpush.bf16.msra.mxu0 %v130
    %140 = vmatpush.bf16.msra.mxu0 %v129
    %141 = vmatpush.bf16.msra.mxu0 %v128
    %142 = vmatpush.bf16.msra.mxu0 %v127
    %143 = vmatpush.bf16.msra.mxu0 %v126
    %144 = vmatpush.bf16.msra.mxu0 %v125
    %145 = vmatpush.bf16.msra.mxu0 %v124
    %146 = vmatpush.bf16.msra.mxu0 %v123
    %147 = vmatmul.bf16.gmra.mxu0 %v70
    %v148 = vpop.f32.mrf.mxu0
    %v149 = vadd.f32 %v89, %v148
    %v150 = vpop.f32.mrf.mxu0
    %151 = vdwg.mxu0
    %152 = vst [vmem:[#allocation2] sm:$0xff] %v149
    // Predicated region
    $region22: #{mlp_forward.1} parent=1 // pred_check
      _
    $region23: #{mlp_forward.1} parent=1 // pred_check_branch
      %154 = sbr.rel (0) target = $region25
    $region24: #{mlp_forward.1} parent=1 // pred_region
      %156 = vsyncadd [#allocation3], 0
      %s158 = sshll.u32 [#allocation2], 4
      %s159 = int_to_ptr.vmem [resolvable:$true] %s158
      %s160 = sshll.u32 %s5, 4
      %s161 = int_to_ptr.hbm [resolvable:$true] %s160
      %163 = dma.vmem_to_hbm [thread:$0]  %s159, 128, %s161, [#allocation3]
    $region25: #{mlp_forward.1} parent=1 // pred_fallthru
      _
    // Predicated region
    $region26: #{mlp_forward.1} parent=1 // pred_check
      _
    $region27: #{mlp_forward.1} parent=1 // pred_check_branch
      %165 = sbr.rel (0) target = $region29
    $region28: #{mlp_forward.1} parent=1 // pred_region
      %167 = dma.done [#allocation3], 128
    $region29: #{mlp_forward.1} parent=1 // pred_fallthru
      _
    %168 = vsyncpa [#allocation3], 1

</llo_original>
